<compile_context>
chip_gen: v7x
topology: tpu7x:2x2x1
jax: 0.10.0
libtpu: 0.0.40
codegen_flags: <defaults>
</compile_context>

<pallas_src>
import jax
import jax.numpy as jnp
from jax import lax
from jax.experimental import pallas as pl
from jax.experimental.pallas import tpu as pltpu


def _round_up(a, b):
    return (a + b - 1) // b * b


def _proj_matmul_kernel(x_ref, w_ref, o_ref, acc_ref):
    """Computes o = x @ w.T, tiled.  x_ref: (tm, tk), w_ref: (tn, tk),
    o_ref/acc_ref: (tm, tn).  Grid axis 2 (K) is the sequential reduction."""
    k = pl.program_id(2)

    @pl.when(k == 0)
    def _():
        acc_ref[...] = jnp.zeros_like(acc_ref)

    # Contract the last dim of both operands (x @ w.T) on the MXU, f32 accum.
    acc_ref[...] += lax.dot_general(
        x_ref[...],
        w_ref[...],
        dimension_numbers=(((1,), (1,)), ((), ())),
        preferred_element_type=jnp.float32,
    )

    @pl.when(k == pl.num_programs(2) - 1)
    def _():
        o_ref[...] = acc_ref[...].astype(o_ref.dtype)


def projection_head(x, w, *, tm_max=256, tn_max=256, tk_max=512):
    """h = x @ w.T with w = nn.Linear.weight of shape (projection_dim, hidden_dim).

    Leading dims of x are flattened into the M axis, projected, then restored.
    """
    *lead, hidden = x.shape
    proj, hidden_w = w.shape
    assert hidden_w == hidden, (hidden_w, hidden)

    x2 = x.reshape(-1, hidden)
    M = x2.shape[0]

    # Tile sizes: vreg/MXU aligned, capped for VMEM headroom on all chips.
    tm = min(tm_max, _round_up(M, 8))
    tk = hidden if hidden <= tk_max else tk_max
    tn = proj if proj <= tn_max else tn_max

    # Zero-pad only where a tile does not evenly cover a dimension.  Zero rows
    # and columns are exact for a bias-free matmul; padding is sliced off.
    Mp = _round_up(M, tm)
    Kp = _round_up(hidden, tk)
    Np = _round_up(proj, tn)
    if (Mp, Kp) != (M, hidden):
        x2 = jnp.pad(x2, ((0, Mp - M), (0, Kp - hidden)))
    if (Np, Kp) != (proj, hidden):
        w = jnp.pad(w, ((0, Np - proj), (0, Kp - hidden)))

    grid = (Mp // tm, Np // tn, Kp // tk)

    out = pl.pallas_call(
        _proj_matmul_kernel,
        out_shape=jax.ShapeDtypeStruct((Mp, Np), x.dtype),
        grid_spec=pltpu.PrefetchScalarGridSpec(
            num_scalar_prefetch=0,
            grid=grid,
            in_specs=[
                pl.BlockSpec((tm, tk), lambda i, j, k: (i, k)),  # x tile
                pl.BlockSpec((tn, tk), lambda i, j, k: (j, k)),  # W tile (P,H layout)
            ],
            out_specs=pl.BlockSpec((tm, tn), lambda i, j, k: (i, j)),
            scratch_shapes=[pltpu.VMEM((tm, tn), jnp.float32)],
        ),
        compiler_params=pltpu.CompilerParams(
            dimension_semantics=("parallel", "parallel", "arbitrary"),
        ),
    )(x2, w)

    h = out[:M, :proj]
    return h.reshape(*lead, proj)


def _ref_projection_head(x, w):
    return jnp.einsum(
        "...h,ph->...p", x.astype(jnp.float32), w.astype(jnp.float32)
    )


if __name__ == "__main__":
    key = jax.random.PRNGKey(0)
    kx, kw = jax.random.split(key)

    # Small shapes consistent with the module defaults (hidden=projection=128).
    batch, seq, hidden_dim, projection_dim = 2, 8, 128, 128
    x = jax.random.normal(kx, (batch, seq, hidden_dim), dtype=jnp.float32)
    # nn.Linear default init: U(-1/sqrt(fan_in), 1/sqrt(fan_in)).
    bound = 1.0 / (hidden_dim ** 0.5)
    w = jax.random.uniform(
        kw, (projection_dim, hidden_dim), jnp.float32, -bound, bound
    )

    h = jax.jit(projection_head)(x, w)
    h = jax.block_until_ready(h)

    ref = _ref_projection_head(x, w).astype(h.dtype)
    assert h.shape == (batch, seq, projection_dim), h.shape
    assert jnp.allclose(h, ref, atol=1e-4, rtol=1e-4), float(
        jnp.max(jnp.abs(h - ref))
    )
    print("KERNEL_OK")
</pallas_src>

<mosaic_0001>
module attributes {stable_mosaic.version = 11 : i64} {
  func.func @_proj_matmul_kernel(%arg0: i32, %arg1: i32, %arg2: i32, %arg3: memref<16x128xf32, #tpu.memory_space<vmem>>, %arg4: memref<128x128xf32, #tpu.memory_space<vmem>>, %arg5: memref<16x128xf32, #tpu.memory_space<vmem>>, %arg6: memref<16x128xf32, #tpu.memory_space<vmem>>) attributes {dimension_semantics = [#tpu.dimension_semantics<parallel>, #tpu.dimension_semantics<parallel>, #tpu.dimension_semantics<arbitrary>], iteration_bounds = array<i64: 1, 1, 1>, scalar_prefetch = 0 : i64, scratch_operands = 1 : i64, tpu.core_type = #tpu.core_type<tc>, window_params = [{transform_indices = @transform_0, window_bounds = array<i64: 16, 128>}, {transform_indices = @transform_1, window_bounds = array<i64: 128, 128>}, {transform_indices = @transform_2, window_bounds = array<i64: 16, 128>}]} {
    %c0_i32 = arith.constant 0 : i32
    %0 = arith.cmpi eq, %arg2, %c0_i32 : i32
    %1 = arith.extui %0 : i1 to i32
    %c0_i32_0 = arith.constant 0 : i32
    %2 = arith.cmpi ne, %1, %c0_i32_0 : i32
    scf.if %2 {
      %cst_10 = arith.constant 0.000000e+00 : f32
      %12 = vector.broadcast %cst_10 : f32 to vector<16x128xf32>
      %c0_11 = arith.constant 0 : index
      %c0_12 = arith.constant 0 : index
      %13 = vector.load %arg6[%c0_11, %c0_12] : memref<16x128xf32, #tpu.memory_space<vmem>>, vector<16x128xf32>
      tpu.vector_store %arg6[%c0_11, %c0_12], %12 {strides = array<i32>} : memref<16x128xf32, #tpu.memory_space<vmem>>, vector<16x128xf32>,
    } else {
    }
    %c0 = arith.constant 0 : index
    %c0_1 = arith.constant 0 : index
    %3 = vector.load %arg6[%c0, %c0_1] : memref<16x128xf32, #tpu.memory_space<vmem>>, vector<16x128xf32>
    %c0_2 = arith.constant 0 : index
    %c0_3 = arith.constant 0 : index
    %4 = vector.load %arg3[%c0_2, %c0_3] : memref<16x128xf32, #tpu.memory_space<vmem>>, vector<16x128xf32>
    %c0_4 = arith.constant 0 : index
    %c0_5 = arith.constant 0 : index
    %5 = vector.load %arg4[%c0_4, %c0_5] : memref<128x128xf32, #tpu.memory_space<vmem>>, vector<128x128xf32>
    %cst = arith.constant dense<0.000000e+00> : vector<16x128xf32>
    %6 = tpu.matmul %4, %5, %cst {dimension_numbers = #tpu.dot_dimension_numbers<[1], [1], [0], [0], [0, 0, 1, 0], [], []>} : vector<16x128xf32>, vector<128x128xf32>, vector<16x128xf32> -> vector<16x128xf32>
    %7 = arith.addf %3, %6 : vector<16x128xf32>
    %c0_6 = arith.constant 0 : index
    %c0_7 = arith.constant 0 : index
    %8 = vector.load %arg6[%c0_6, %c0_7] : memref<16x128xf32, #tpu.memory_space<vmem>>, vector<16x128xf32>
    tpu.vector_store %arg6[%c0_6, %c0_7], %7 {strides = array<i32>} : memref<16x128xf32, #tpu.memory_space<vmem>>, vector<16x128xf32>,
    %c0_i32_8 = arith.constant 0 : i32
    %9 = arith.cmpi eq, %arg2, %c0_i32_8 : i32
    %10 = arith.extui %9 : i1 to i32
    %c0_i32_9 = arith.constant 0 : i32
    %11 = arith.cmpi ne, %10, %c0_i32_9 : i32
    scf.if %11 {
      %c0_10 = arith.constant 0 : index
      %c0_11 = arith.constant 0 : index
      %12 = vector.load %arg6[%c0_10, %c0_11] : memref<16x128xf32, #tpu.memory_space<vmem>>, vector<16x128xf32>
      %c0_12 = arith.constant 0 : index
      %c0_13 = arith.constant 0 : index
      %13 = vector.load %arg5[%c0_12, %c0_13] : memref<16x128xf32, #tpu.memory_space<vmem>>, vector<16x128xf32>
      tpu.vector_store %arg5[%c0_12, %c0_13], %12 {strides = array<i32>} : memref<16x128xf32, #tpu.memory_space<vmem>>, vector<16x128xf32>,
    } else {
    }
    return
  }
  func.func @transform_0(%arg0: i32, %arg1: i32, %arg2: i32) -> (i32, i32) {
    %c0_i32 = arith.constant 0 : i32
    return %arg0, %arg2 : i32, i32
  }
  func.func @transform_1(%arg0: i32, %arg1: i32, %arg2: i32) -> (i32, i32) {
    %c0_i32 = arith.constant 0 : i32
    return %arg1, %arg2 : i32, i32
  }
  func.func @transform_2(%arg0: i32, %arg1: i32, %arg2: i32) -> (i32, i32) {
    %c0_i32 = arith.constant 0 : i32
    return %arg0, %arg1 : i32, i32
  }
}

</mosaic_0001>

<llo_original>
// kernel: projection_head.1
$region0: #{projection_head.1}
  #allocation0 [shape = 'u32[]', space=smem, size = 0x4, offset = 0x4, fixed_abs, tag = 'smem constant byte address 0x4 - core index']
  #allocation1 [shape = 'u32[144,128]{1,0:T(1,128)}', space=vmem, size = 0x12000, scoped, tag = 'internal scratch']
  #allocation2 [shape = 'f32[16,128]{1,0:T(8,128)}', space=vmem, size = 0x2000, scoped, tag = 'scratch operand']
  %s0 = inlined_call_operand.hbm [shape: f32[16,128], index: 0, kind: input, shape index: {}]
  %s1 = inlined_call_operand.hbm [shape: f32[128,128], index: 1, kind: input, shape index: {}]
  %s2 = inlined_call_operand.hbm [shape: f32[16,128], index: 2, kind: output, shape index: {}]
  %s3 = sld [smem:[#allocation0]]
  $region34: #{projection_head.1} parent=0
    _
  %s5 = ssub.s32 1, %s3
  %s6 = scalar_select 0, %s5, %s3
  $region1: #{projection_head.1} parent=0
    #allocation3 [shape = 'u8[8192]{0}', space=vmem, size = 0x2000, scoped, tag = 'input window, operand 0, single buffered']
    #allocation4 [shape = 's32[1]{0}', space=sflag, size = 0x4, scoped, tag = 'scoped memory for projection_head.1']
    #allocation5 [shape = 's32[1]{0}', space=sflag, size = 0x4, scoped, tag = 'scoped memory for projection_head.1']
    #allocation6 [shape = 'u8[65536]{0}', space=vmem, size = 0x10000, scoped, tag = 'input window, operand 1, single buffered']
    #allocation7 [shape = 's32[1]{0}', space=sflag, size = 0x4, scoped, tag = 'scoped memory for projection_head.1']
    #allocation8 [shape = 'u8[8192]{0}', space=vmem, size = 0x2000, scoped, tag = 'output window, operand 0, single buffered']
    %7 = vsyncpa [#allocation4], 0
    %8 = vsyncpa [#allocation7], 0
    %9 = vsyncpa [#allocation5], 0
    // Predicated region
    $region2: #{projection_head.1} parent=1 // pred_check
      _
    $region3: #{projection_head.1} parent=1 // pred_check_branch
      %11 = sbr.rel (0) target = $region5
    $region4: #{projection_head.1} parent=1 // pred_region
      %s13 = ssub.s32 256, 256
      %14 = vsyncadd [#allocation4], %s13
      %s15 = sshll.u32 [#allocation3], 4
      %s16 = int_to_ptr.vmem [resolvable:$true] %s15
      %21 = dma.hbm_to_vmem [thread:$0]  %s0, 256, %s16, [#allocation4], 128, 128, 8
    $region5: #{projection_head.1} parent=1 // pred_fallthru
      _
    // Predicated region
    $region6: #{projection_head.1} parent=1 // pred_check
      _
    $region7: #{projection_head.1} parent=1 // pred_check_branch
      %23 = sbr.rel (0) target = $region9
    $region8: #{projection_head.1} parent=1 // pred_region
      %s25 = ssub.s32 2048, 2048
      %26 = vsyncadd [#allocation7], %s25
      %s27 = sshll.u32 [#allocation6], 4
      %s28 = int_to_ptr.vmem [resolvable:$true] %s27
      %33 = dma.hbm_to_vmem [thread:$0]  %s1, 2048, %s28, [#allocation7], 128, 128, 8
    $region9: #{projection_head.1} parent=1 // pred_fallthru
      _
    // Predicated region
    $region10: #{projection_head.1} parent=1 // pred_check
      _
    $region11: #{projection_head.1} parent=1 // pred_check_branch
      %35 = sbr.rel (0) target = $region13
    $region12: #{projection_head.1} parent=1 // pred_region
      %36 = dma.done [#allocation4], 256
    $region13: #{projection_head.1} parent=1 // pred_fallthru
      _
    // Predicated region
    $region14: #{projection_head.1} parent=1 // pred_check
      _
    $region15: #{projection_head.1} parent=1 // pred_check_branch
      %38 = sbr.rel (0) target = $region17
    $region16: #{projection_head.1} parent=1 // pred_region
      %39 = dma.done [#allocation7], 2048
    $region17: #{projection_head.1} parent=1 // pred_fallthru
      _
    %p40 = scmp.eq.s32.totalorder 0, 0
    // Predicated region
    $region18: #{projection_head.1} parent=1 // pred_check
      %p41 = pneg %p40
    $region19: #{projection_head.1} parent=1 // pred_check_branch
      %43 = sbr.rel (%p41) target = $region21
    $region20: #{projection_head.1} parent=1 // pred_region
      %44 = vst [vmem:[#allocation2] sm:$0xff] 0.0
      %45 = vst [vmem:[#allocation2 + $0x8] sm:$0xff] 0.0
    $region21: #{projection_head.1} parent=1 // pred_fallthru
      _
    %v46 = vld [vmem:[#allocation2] sm:$0xff]
    %v47 = vld [vmem:[#allocation2 + $0x8] sm:$0xff]
    %v48 = vld [vmem:[#allocation3] sm:$0xff]
    %v49 = vld [vmem:[#allocation3 + $0x8] sm:$0xff]
    %v50 = vld [vmem:[#allocation6] sm:$0xff]
    %v51 = vld [vmem:[#allocation6 + $0x8] sm:$0xff]
    %v52 = vld [vmem:[#allocation6 + $0x10] sm:$0xff]
    %v53 = vld [vmem:[#allocation6 + $0x18] sm:$0xff]
    %v54 = vld [vmem:[#allocation6 + $0x20] sm:$0xff]
    %v55 = vld [vmem:[#allocation6 + $0x28] sm:$0xff]
    %v56 = vld [vmem:[#allocation6 + $0x30] sm:$0xff]
    %v57 = vld [vmem:[#allocation6 + $0x38] sm:$0xff]
    %v58 = vld [vmem:[#allocation6 + $0x40] sm:$0xff]
    %v59 = vld [vmem:[#allocation6 + $0x48] sm:$0xff]
    %v60 = vld [vmem:[#allocation6 + $0x50] sm:$0xff]
    %v61 = vld [vmem:[#allocation6 + $0x58] sm:$0xff]
    %v62 = vld [vmem:[#allocation6 + $0x60] sm:$0xff]
    %v63 = vld [vmem:[#allocation6 + $0x68] sm:$0xff]
    %v64 = vld [vmem:[#allocation6 + $0x70] sm:$0xff]
    %v65 = vld [vmem:[#allocation6 + $0x78] sm:$0xff]
    %66 = vmatprep.subr.mxu0 0.0
    %67 = vmatpush1.xpose.msra.mxu0 %v50
    %68 = vmatprep.subr.mxu0 0.0
    %69 = vmatpush1.xpose.msra.mxu0 %v51
    %70 = vmatprep.subr.mxu0 0.0
    %71 = vmatpush1.xpose.msra.mxu0 %v52
    %72 = vmatprep.subr.mxu0 0.0
    %73 = vmatpush1.xpose.msra.mxu0 %v53
    %74 = vmatprep.subr.mxu0 0.0
    %75 = vmatpush1.xpose.msra.mxu0 %v54
    %76 = vmatprep.subr.mxu0 0.0
    %77 = vmatpush1.xpose.msra.mxu0 %v55
    %78 = vmatprep.subr.mxu0 0.0
    %79 = vmatpush1.xpose.msra.mxu0 %v56
    %80 = vmatprep.subr.mxu0 0.0
    %81 = vmatpush1.xpose.msra.mxu0 %v57
    %82 = vmatprep.subr.mxu0 0.0
    %83 = vmatpush1.xpose.msra.mxu0 %v58
    %84 = vmatprep.subr.mxu0 0.0
    %85 = vmatpush1.xpose.msra.mxu0 %v59
    %86 = vmatprep.subr.mxu0 0.0
    %87 = vmatpush1.xpose.msra.mxu0 %v60
    %88 = vmatprep.subr.mxu0 0.0
    %89 = vmatpush1.xpose.msra.mxu0 %v61
    %90 = vmatprep.subr.mxu0 0.0
    %91 = vmatpush1.xpose.msra.mxu0 %v62
    %92 = vmatprep.subr.mxu0 0.0
    %93 = vmatpush1.xpose.msra.mxu0 %v63
    %94 = vmatprep.subr.mxu0 0.0
    %95 = vmatpush1.xpose.msra.mxu0 %v64
    %96 = vmatprep.subr.mxu0 0.0
    %97 = vmatpush1.xpose.msra.mxu0 %v65
    %98 = vmatprep.subr.mxu0 0.0
    %99 = vmatpush1.xpose.msra.mxu0 0.0
    %100 = vmatprep.subr.mxu0 0.0
    %101 = vmatpush1.xpose.msra.mxu0 0.0
    %102 = vmatprep.subr.mxu0 0.0
    %103 = vmatpush1.xpose.msra.mxu0 0.0
    %104 = vmatprep.subr.mxu0 0.0
    %105 = vmatpush1.xpose.msra.mxu0 0.0
    %106 = vmatprep.subr.mxu0 0.0
    %107 = vmatpush1.xpose.msra.mxu0 0.0
    %108 = vmatprep.subr.mxu0 0.0
    %109 = vmatpush1.xpose.msra.mxu0 0.0
    %110 = vmatprep.subr.mxu0 0.0
    %111 = vmatpush1.xpose.msra.mxu0 0.0
    %112 = vmatprep.subr.mxu0 0.0
    %113 = vmatpush1.xpose.msra.mxu0 0.0
    %114 = vmatprep.subr.mxu0 0.0
    %115 = vmatpush1.xpose.msra.mxu0 0.0
    %116 = vmatprep.subr.mxu0 0.0
    %117 = vmatpush1.xpose.msra.mxu0 0.0
    %118 = vmatprep.subr.mxu0 0.0
    %119 = vmatpush1.xpose.msra.mxu0 0.0
    %120 = vmatprep.subr.mxu0 0.0
    %121 = vmatpush1.xpose.msra.mxu0 0.0
    %122 = vmatprep.subr.mxu0 0.0
    %123 = vmatpush1.xpose.msra.mxu0 0.0
    %124 = vmatprep.subr.mxu0 0.0
    %125 = vmatpush1.xpose.msra.mxu0 0.0
    %126 = vmatprep.subr.mxu0 0.0
    %127 = vmatpush1.xpose.msra.mxu0 0.0
    %128 = vmatprep.subr.mxu0 0.0
    %129 = vmatpush1.xpose.msra.mxu0 0.0
    %130 = vmatprep.mubr.f32.mxu0 0.0
    %131 = vmatmul.mubr.f32.gmra.mrb[0].mxu0 %v48
    %v132 = vpop.f32.mrb[0].mxu0
    %v133 = vadd.f32 0.0, %v132
    %v134 = vpop.f32.mrb[0].mxu0
    %135 = vmatprep.mubr.f32.mxu0 0.0
    %136 = vmatmul.mubr.f32.gmra.mrb[0].mxu0 %v49
    %v137 = vpop.f32.mrb[0].mxu0
    %v138 = vadd.f32 0.0, %v137
    %v139 = vpop.f32.mrb[0].mxu0
    %140 = vdwg.mxu0
    %v141 = vadd.f32 %v46, %v133
    %v142 = vadd.f32 %v47, %v138
    %143 = vst [vmem:[#allocation2] sm:$0xff] %v141
    %144 = vst [vmem:[#allocation2 + $0x8] sm:$0xff] %v142
    // Predicated region
    $region22: #{projection_head.1} parent=1 // pred_check
      %p145 = pneg %p40
    $region23: #{projection_head.1} parent=1 // pred_check_branch
      %147 = sbr.rel (%p145) target = $region25
    $region24: #{projection_head.1} parent=1 // pred_region
      %v148 = vld [vmem:[#allocation2] sm:$0xff]
      %v149 = vld [vmem:[#allocation2 + $0x8] sm:$0xff]
      %150 = vst [vmem:[#allocation8] sm:$0xff] %v148
      %151 = vst [vmem:[#allocation8 + $0x8] sm:$0xff] %v149
    $region25: #{projection_head.1} parent=1 // pred_fallthru
      _
    // Predicated region
    $region26: #{projection_head.1} parent=1 // pred_check
      _
    $region27: #{projection_head.1} parent=1 // pred_check_branch
      %153 = sbr.rel (0) target = $region29
    $region28: #{projection_head.1} parent=1 // pred_region
      %s155 = ssub.s32 256, 256
      %156 = vsyncadd [#allocation5], %s155
      %s157 = sshll.u32 [#allocation8], 4
      %s158 = int_to_ptr.vmem [resolvable:$true] %s157
      %163 = dma.vmem_to_hbm [thread:$0]  %s158, 256, %s2, [#allocation5], 128, 128, 8
    $region29: #{projection_head.1} parent=1 // pred_fallthru
      _
    // Predicated region
    $region30: #{projection_head.1} parent=1 // pred_check
      _
    $region31: #{projection_head.1} parent=1 // pred_check_branch
      %165 = sbr.rel (0) target = $region33
    $region32: #{projection_head.1} parent=1 // pred_region
      %166 = dma.done [#allocation5], 256
    $region33: #{projection_head.1} parent=1 // pred_fallthru
      _
    %167 = vsyncpa [#allocation4], 1
    %168 = vsyncpa [#allocation7], 1
    %169 = vsyncpa [#allocation5], 1

</llo_original>
